<compile_context>
chip_gen: v5e
topology: v5e:2x2
jax: 0.10.0
libtpu: 0.0.40
codegen_flags: <defaults>
</compile_context>

<pallas_src>
import jax
import jax.numpy as jnp
from jax import lax
from jax.experimental import pallas as pl
from jax.experimental.pallas import tpu as pltpu


def _vmem_budgets():
    """Generation-aware (scoped-VMEM limit, streamed-tile budget) in bytes."""
    try:
        phys = getattr(pltpu.get_tpu_info(), "vmem_capacity_bytes", None)
    except Exception:
        phys = None
    if phys is None:
        return 32 << 20, 12 << 20            # conservative fallback
    if phys >= (100 << 20):                   # v5e / v6e: 128 MiB physical
        return 80 << 20, 28 << 20
    return 48 << 20, 16 << 20                 # v7x: 64 MiB physical


def _choose_batch_tile(B, H, budget):
    """Number of batches packed into one grid step (divisor of B).

    Caps: (a) keep nb = B // bt >= 2 when B allows, so v7x's two TensorCores
    both get work on the "parallel" batch axis; (b) packed width bt*H <= 256
    (MXU N dim; the packed score matrix grows quadratically); (c) the resident
    (bt*H)^2 f32 score scratch stays well inside the streamed-tile budget.
    """
    cap = B
    if B >= 2:
        cap = min(cap, B // 2)
    cap = min(cap, max(1, 256 // max(H, 1)))
    bt = 1
    for c in range(1, cap + 1):
        if B % c == 0 and 4 * (c * H) ** 2 <= budget // 4:
            bt = c
    return bt


def _choose_f_tile(F_pad, H, bt, budget):
    """Largest F tile (multiple of 128 dividing F_pad, or F_pad itself).

    Per grid step: Q, K, V and the output tile are each double-buffered
    (4 arrays x 2 buffers x bt*H*tf*4 B) plus the resident packed score
    scratch of (bt*H)^2 * 4 B.
    """
    avail = max(budget - 4 * (bt * H) ** 2, 32 * bt * H * 128)
    cap = max(128, avail // (32 * bt * H))
    if F_pad <= cap:
        return F_pad
    t = (cap // 128) * 128
    while t >= 128:
        if F_pad % t == 0:
            return t
        t -= 128
    return 128


def _attention_bhf(q, k, v):
    """q, k, v: (B, H, F) f32.  Returns softmax(q @ k^T, -1) @ v, (B, H, F)."""
    B, H, F = q.shape
    vmem_limit, budget = _vmem_budgets()

    # Pad F to a lane multiple so every streamed tile is lane-dense and the
    # tile search never blows the budget for awkward F.  Zero-padded Q/K
    # columns add nothing to the logits; padded output columns are sliced off.
    F_pad = F if (F <= 128 or F % 128 == 0) else ((F + 127) // 128) * 128
    if F_pad != F:
        pad = ((0, 0), (0, 0), (0, F_pad - F))
        q = jnp.pad(q, pad)
        k = jnp.pad(k, pad)
        v = jnp.pad(v, pad)

    bt = _choose_batch_tile(B, H, budget)
    tf = _choose_f_tile(F_pad, H, bt, budget)
    nb, nf = B // bt, F_pad // tf
    hp = bt * H                                  # packed attention width

    def kernel(q_ref, k_ref, v_ref, o_ref, p_ref):
        t = pl.program_id(1)

        @pl.when(t == 0)
        def _init():
            p_ref[...] = jnp.zeros_like(p_ref)

        @pl.when(t < nf)
        def _accumulate_scores():
            qb = q_ref[...].reshape(hp, tf)
            kb = k_ref[...].reshape(hp, tf)
            # NT contraction over the feature dim of both operands: plays the
            # role of x_t.permute(0, 2, 1) with no in-VMEM transpose.
            p_ref[...] += lax.dot_general(
                qb, kb, (((1,), (1,)), ((), ())),
                preferred_element_type=jnp.float32)

        @pl.when(t == nf - 1)
        def _softmax():
            s = p_ref[...]
            if bt > 1:
                # Batch-packed scores: knock out cross-batch blocks so the
                # softmax / P @ V stay exactly block-diagonal per batch.
                row = lax.broadcasted_iota(jnp.int32, (hp, hp), 0) // H
                col = lax.broadcasted_iota(jnp.int32, (hp, hp), 1) // H
                s = jnp.where(row == col, s, -1e30)
            s = s - jnp.max(s, axis=-1, keepdims=True)
            e = jnp.exp(s)
            den = jnp.sum(e, axis=-1, keepdims=True)
            r = pl.reciprocal(den, approx=True)      # EUP vrcp (free slot)
            r = r * (2.0 - den * r)                  # one Newton step -> ~f32
            p_ref[...] = e * r

        @pl.when(t >= nf)
        def _apply():
            vb = v_ref[...].reshape(hp, tf)
            ob = jnp.dot(p_ref[...], vb, preferred_element_type=jnp.float32)
            o_ref[...] = ob.reshape(bt, H, tf).astype(o_ref.dtype)

    # Phase-folded grid: t in [0, nf) accumulates scores (Q/K streamed),
    # t in [nf, 2nf) applies P to V tiles.  Index maps clamp so Q/K are not
    # re-fetched in phase 1 and V/out sit on block 0 during phase 0.
    qk_spec = pl.BlockSpec((bt, H, tf),
                           lambda b, t: (b, 0, jnp.minimum(t, nf - 1)))
    vo_spec = pl.BlockSpec((bt, H, tf),
                           lambda b, t: (b, 0, jnp.maximum(t - nf, 0)))

    out = pl.pallas_call(
        kernel,
        out_shape=jax.ShapeDtypeStruct((B, H, F_pad), q.dtype),
        grid_spec=pltpu.PrefetchScalarGridSpec(
            num_scalar_prefetch=0,
            grid=(nb, 2 * nf),
            in_specs=[qk_spec, qk_spec, vo_spec],
            out_specs=vo_spec,
            scratch_shapes=[pltpu.VMEM((hp, hp), jnp.float32)],
        ),
        compiler_params=pltpu.CompilerParams(
            dimension_semantics=("parallel", "arbitrary"),
            vmem_limit_bytes=vmem_limit),
        cost_estimate=pl.CostEstimate(
            flops=4 * nb * hp * hp * F_pad,
            transcendentals=nb * hp * hp,
            bytes_accessed=16 * B * H * F_pad),
    )(q, k, v)

    if F_pad != F:
        out = out[:, :, :F]
    return out


def sa_coronal_block(x_, x_t, g_x):
    """JAX/Pallas equivalent of saCoronalBlock.forward.

    x_, x_t, g_x: (B, C, D, H, W) arrays.  Returns (B, C, D, H, W).
    """
    B, C, D, H, W = x_.shape
    F = D * C * W

    # TODO(synk): fuse this NCDHW <-> (B, H, F) relayout into the kernel (or
    # have the producer emit the attention layout directly) — it re-reads and
    # re-writes every operand of an already HBM-bound kernel.
    def to_bhf(t):
        # permute(0, 3, 2, 1, 4) -> (B, H, D, C, W), flatten -> (B, H, D*C*W)
        return jnp.transpose(t, (0, 3, 2, 1, 4)).reshape(B, H, F)

    q = to_bhf(x_)
    k = to_bhf(x_t)
    v = to_bhf(g_x)

    out = _attention_bhf(q, k, v)                # (B, H, F)
    out = out.reshape(B, H, D, C, W)
    return jnp.transpose(out, (0, 3, 2, 1, 4))   # back to (B, C, D, H, W)


def _reference(x_, x_t, g_x):
    """Pure-JAX reference mirroring the PyTorch module line-by-line."""
    B, C, D, H, W = x_.shape
    q = jnp.transpose(x_, (0, 3, 2, 1, 4)).reshape(B, H, -1)
    v = jnp.transpose(g_x, (0, 3, 2, 1, 4)).reshape(B, H, -1)
    kt = jnp.transpose(jnp.transpose(x_t, (0, 3, 2, 1, 4)).reshape(B, H, -1),
                       (0, 2, 1))
    att = jax.nn.softmax(jnp.einsum('bhf,bfk->bhk', q, kt), axis=-1)
    out = jnp.einsum('bhk,bkf->bhf', att, v)
    out = out.reshape(B, H, D, C, W)
    return jnp.transpose(out, (0, 3, 2, 1, 4))


if __name__ == "__main__":
    # Small shapes: B=2, C=4, D=8, H=16 (coronal), W=8  ->  F = D*C*W = 256
    B, C, D, H, W = 2, 4, 8, 16, 8
    key = jax.random.PRNGKey(0)
    k1, k2, k3 = jax.random.split(key, 3)
    x_ = jax.random.normal(k1, (B, C, D, H, W), dtype=jnp.float32)
    x_t = jax.random.normal(k2, (B, C, D, H, W), dtype=jnp.float32)
    g_x = jax.random.normal(k3, (B, C, D, H, W), dtype=jnp.float32)

    out = jax.block_until_ready(jax.jit(sa_coronal_block)(x_, x_t, g_x))
    ref = jax.block_until_ready(_reference(x_, x_t, g_x))

    assert out.shape == (B, C, D, H, W), out.shape
    assert jnp.allclose(out, ref, atol=1e-4, rtol=1e-4), \
        float(jnp.max(jnp.abs(out - ref)))
    print("KERNEL_OK")
</pallas_src>

<mosaic_0001>
module attributes {stable_mosaic.version = 11 : i64} {
  func.func @kernel(%arg0: i32, %arg1: i32, %arg2: memref<1x16x256xf32, #tpu.memory_space<vmem>>, %arg3: memref<1x16x256xf32, #tpu.memory_space<vmem>>, %arg4: memref<1x16x256xf32, #tpu.memory_space<vmem>>, %arg5: memref<1x16x256xf32, #tpu.memory_space<vmem>>, %arg6: memref<16x16xf32, #tpu.memory_space<vmem>>) attributes {dimension_semantics = [#tpu.dimension_semantics<parallel>, #tpu.dimension_semantics<arbitrary>], iteration_bounds = array<i64: 2, 2>, scalar_prefetch = 0 : i64, scratch_operands = 1 : i64, tpu.core_type = #tpu.core_type<tc>, window_params = [{transform_indices = @transform_0, window_bounds = array<i64: 1, 16, 256>}, {transform_indices = @transform_1, window_bounds = array<i64: 1, 16, 256>}, {transform_indices = @transform_2, window_bounds = array<i64: 1, 16, 256>}, {transform_indices = @transform_3, window_bounds = array<i64: 1, 16, 256>}]} {
    %c0_i32 = arith.constant 0 : i32
    %0 = arith.cmpi eq, %arg1, %c0_i32 : i32
    %1 = arith.extui %0 : i1 to i32
    %c0_i32_0 = arith.constant 0 : i32
    %2 = arith.cmpi ne, %1, %c0_i32_0 : i32
    scf.if %2 {
      %cst = arith.constant 0.000000e+00 : f32
      %12 = vector.broadcast %cst : f32 to vector<16x16xf32>
      %c0 = arith.constant 0 : index
      %c0_6 = arith.constant 0 : index
      %13 = vector.load %arg6[%c0, %c0_6] : memref<16x16xf32, #tpu.memory_space<vmem>>, vector<16x16xf32>
      tpu.vector_store %arg6[%c0, %c0_6], %12 {strides = array<i32>} : memref<16x16xf32, #tpu.memory_space<vmem>>, vector<16x16xf32>,
    } else {
    }
    %c1_i32 = arith.constant 1 : i32
    %3 = arith.cmpi slt, %arg1, %c1_i32 : i32
    %4 = arith.extui %3 : i1 to i32
    %c0_i32_1 = arith.constant 0 : i32
    %5 = arith.cmpi ne, %4, %c0_i32_1 : i32
    scf.if %5 {
      %c0 = arith.constant 0 : index
      %c0_6 = arith.constant 0 : index
      %c0_7 = arith.constant 0 : index
      %12 = vector.load %arg2[%c0, %c0_6, %c0_7] : memref<1x16x256xf32, #tpu.memory_space<vmem>>, vector<1x16x256xf32>
      %13 = vector.shape_cast %12 : vector<1x16x256xf32> to vector<16x256xf32>
      %c0_8 = arith.constant 0 : index
      %c0_9 = arith.constant 0 : index
      %c0_10 = arith.constant 0 : index
      %14 = vector.load %arg3[%c0_8, %c0_9, %c0_10] : memref<1x16x256xf32, #tpu.memory_space<vmem>>, vector<1x16x256xf32>
      %15 = vector.shape_cast %14 : vector<1x16x256xf32> to vector<16x256xf32>
      %c0_11 = arith.constant 0 : index
      %c0_12 = arith.constant 0 : index
      %16 = vector.load %arg6[%c0_11, %c0_12] : memref<16x16xf32, #tpu.memory_space<vmem>>, vector<16x16xf32>
      %cst = arith.constant dense<0.000000e+00> : vector<16x16xf32>
      %17 = tpu.matmul %13, %15, %cst {dimension_numbers = #tpu.dot_dimension_numbers<[1], [1], [0], [0], [0, 0, 1, 0], [], []>} : vector<16x256xf32>, vector<16x256xf32>, vector<16x16xf32> -> vector<16x16xf32>
      %18 = arith.addf %16, %17 : vector<16x16xf32>
      %c0_13 = arith.constant 0 : index
      %c0_14 = arith.constant 0 : index
      %19 = vector.load %arg6[%c0_13, %c0_14] : memref<16x16xf32, #tpu.memory_space<vmem>>, vector<16x16xf32>
      tpu.vector_store %arg6[%c0_13, %c0_14], %18 {strides = array<i32>} : memref<16x16xf32, #tpu.memory_space<vmem>>, vector<16x16xf32>,
    } else {
    }
    %c0_i32_2 = arith.constant 0 : i32
    %6 = arith.cmpi eq, %arg1, %c0_i32_2 : i32
    %7 = arith.extui %6 : i1 to i32
    %c0_i32_3 = arith.constant 0 : i32
    %8 = arith.cmpi ne, %7, %c0_i32_3 : i32
    scf.if %8 {
      %c0 = arith.constant 0 : index
      %c0_6 = arith.constant 0 : index
      %12 = vector.load %arg6[%c0, %c0_6] : memref<16x16xf32, #tpu.memory_space<vmem>>, vector<16x16xf32>
      %cst = arith.constant dense<0xFF800000> : vector<16xf32>
      %13 = vector.multi_reduction <maximumf>, %12, %cst [1] : vector<16x16xf32> to vector<16xf32>
      %14 = vector.shape_cast %13 : vector<16xf32> to vector<16x1xf32>
      %15 = vector.broadcast %14 : vector<16x1xf32> to vector<16x16xf32>
      %16 = arith.subf %12, %15 : vector<16x16xf32>
      %17 = math.exp %16 : vector<16x16xf32>
      %cst_7 = arith.constant dense<0.000000e+00> : vector<16xf32>
      %18 = vector.multi_reduction <add>, %17, %cst_7 [1] : vector<16x16xf32> to vector<16xf32>
      %19 = vector.shape_cast %18 : vector<16xf32> to vector<16x1xf32>
      %20 = tpu.reciprocal %19 {approx = true} : vector<16x1xf32> -> vector<16x1xf32>
      %21 = arith.mulf %19, %20 : vector<16x1xf32>
      %cst_8 = arith.constant 2.000000e+00 : f32
      %22 = vector.broadcast %cst_8 : f32 to vector<16x1xf32>
      %23 = arith.subf %22, %21 : vector<16x1xf32>
      %24 = arith.mulf %20, %23 : vector<16x1xf32>
      %25 = vector.broadcast %24 : vector<16x1xf32> to vector<16x16xf32>
      %26 = arith.mulf %17, %25 : vector<16x16xf32>
      %c0_9 = arith.constant 0 : index
      %c0_10 = arith.constant 0 : index
      %27 = vector.load %arg6[%c0_9, %c0_10] : memref<16x16xf32, #tpu.memory_space<vmem>>, vector<16x16xf32>
      tpu.vector_store %arg6[%c0_9, %c0_10], %26 {strides = array<i32>} : memref<16x16xf32, #tpu.memory_space<vmem>>, vector<16x16xf32>,
    } else {
    }
    %c1_i32_4 = arith.constant 1 : i32
    %9 = arith.cmpi sge, %arg1, %c1_i32_4 : i32
    %10 = arith.extui %9 : i1 to i32
    %c0_i32_5 = arith.constant 0 : i32
    %11 = arith.cmpi ne, %10, %c0_i32_5 : i32
    scf.if %11 {
      %c0 = arith.constant 0 : index
      %c0_6 = arith.constant 0 : index
      %c0_7 = arith.constant 0 : index
      %12 = vector.load %arg4[%c0, %c0_6, %c0_7] : memref<1x16x256xf32, #tpu.memory_space<vmem>>, vector<1x16x256xf32>
      %13 = vector.shape_cast %12 : vector<1x16x256xf32> to vector<16x256xf32>
      %c0_8 = arith.constant 0 : index
      %c0_9 = arith.constant 0 : index
      %14 = vector.load %arg6[%c0_8, %c0_9] : memref<16x16xf32, #tpu.memory_space<vmem>>, vector<16x16xf32>
      %cst = arith.constant dense<0.000000e+00> : vector<16x256xf32>
      %15 = tpu.matmul %14, %13, %cst {dimension_numbers = #tpu.dot_dimension_numbers<[1], [0], [0], [1], [0, 0, 1, 1], [], []>} : vector<16x16xf32>, vector<16x256xf32>, vector<16x256xf32> -> vector<16x256xf32>
      %16 = vector.shape_cast %15 : vector<16x256xf32> to vector<1x16x256xf32>
      %c0_10 = arith.constant 0 : index
      %c0_11 = arith.constant 0 : index
      %c0_12 = arith.constant 0 : index
      %17 = vector.load %arg5[%c0_10, %c0_11, %c0_12] : memref<1x16x256xf32, #tpu.memory_space<vmem>>, vector<1x16x256xf32>
      tpu.vector_store %arg5[%c0_10, %c0_11, %c0_12], %16 {strides = array<i32>} : memref<1x16x256xf32, #tpu.memory_space<vmem>>, vector<1x16x256xf32>,
    } else {
    }
    return
  }
  func.func @transform_0(%arg0: i32, %arg1: i32) -> (i32, i32, i32) {
    %c0_i32 = arith.constant 0 : i32
    %0 = arith.minsi %arg1, %c0_i32 : i32
    %c0_i32_0 = arith.constant 0 : i32
    %c0_i32_1 = arith.constant 0 : i32
    return %arg0, %c0_i32_0, %0 : i32, i32, i32
  }
  func.func @transform_1(%arg0: i32, %arg1: i32) -> (i32, i32, i32) {
    %c0_i32 = arith.constant 0 : i32
    %0 = arith.minsi %arg1, %c0_i32 : i32
    %c0_i32_0 = arith.constant 0 : i32
    %c0_i32_1 = arith.constant 0 : i32
    return %arg0, %c0_i32_0, %0 : i32, i32, i32
  }
  func.func @transform_2(%arg0: i32, %arg1: i32) -> (i32, i32, i32) {
    %c1_i32 = arith.constant 1 : i32
    %0 = arith.subi %arg1, %c1_i32 : i32
    %c0_i32 = arith.constant 0 : i32
    %1 = arith.maxsi %0, %c0_i32 : i32
    %c0_i32_0 = arith.constant 0 : i32
    %c0_i32_1 = arith.constant 0 : i32
    return %arg0, %c0_i32_0, %1 : i32, i32, i32
  }
  func.func @transform_3(%arg0: i32, %arg1: i32) -> (i32, i32, i32) {
    %c1_i32 = arith.constant 1 : i32
    %0 = arith.subi %arg1, %c1_i32 : i32
    %c0_i32 = arith.constant 0 : i32
    %1 = arith.maxsi %0, %c0_i32 : i32
    %c0_i32_0 = arith.constant 0 : i32
    %c0_i32_1 = arith.constant 0 : i32
    return %arg0, %c0_i32_0, %1 : i32, i32, i32
  }
}

</mosaic_0001>

<llo_original>
// kernel: sa_coronal_block.1
$region0: #{sa_coronal_block.1}
  #allocation0 [shape = 'u32[]', space=smem, size = 0x4, offset = 0x4, fixed_abs, tag = 'smem constant byte address 0x4 - core index']
  #allocation1 [shape = 'u32[72,128]{1,0:T(1,128)}', space=vmem, size = 0x9000, scoped, tag = 'internal scratch']
  #allocation2 [shape = 'f32[16,16]{1,0:T(8,128)}', space=vmem, size = 0x2000, scoped, tag = 'scratch operand']
  %s0 = inlined_call_operand.vmem [shape: f32[2,16,256], index: 0, kind: input, shape index: {}]
  %s1 = inlined_call_operand.vmem [shape: f32[2,16,256], index: 1, kind: input, shape index: {}]
  %s2 = inlined_call_operand.vmem [shape: f32[2,16,256], index: 2, kind: input, shape index: {}]
  %s3 = inlined_call_operand.vmem [shape: f32[2,16,256], index: 3, kind: output, shape index: {}]
  %s4 = sld [smem:[#allocation0]]
  $region61: #{sa_coronal_block.1} parent=0
    _
  %s6 = ssub.s32 1, %s4
  %s7 = scalar_select 0, %s6, %s4
  loop: start=0, step=1, limit=6
  $region2: #{sa_coronal_block.1} parent=0 // loop_pre_header
    _
  $region3: #{sa_coronal_block.1} parent=0 // loop_header
    %s9 = sphi 0, %s13
    %p10 = scmp.ge.s32.totalorder %s9, 6
    %s16 = sphi 0, %s28
    %s17 = sphi 0, %s24
    %s18 = sphi 0, %s16
    %s19 = sphi 0, %s17
    %s20 = sphi 0, %s18
    %s21 = sphi 0, %s19
    %s37 = sphi 0, %s39
    %s40 = sphi 0, %s37
    %s41 = sphi 0, %s40
    %s57 = sphi 0, %s41
    %s69 = sphi 0, %s71
    %s72 = sphi 0, %s69
    %s73 = sphi 0, %s72
    %s89 = sphi 0, %s73
    %s103 = sphi 0, %s105
    %s106 = sphi 0, %s103
    %s107 = sphi 0, %s106
    %s123 = sphi 0, %s107
    %s137 = sphi 0, %s139
    %s140 = sphi 0, %s137
    %s141 = sphi 0, %s140
    %s157 = sphi 0, %s141
  $region4: #{sa_coronal_block.1} parent=0 // loop_header_branch
    %12 = sbr.rel (%p10) target = $region8
  $region5: #{sa_coronal_block.1} parent=0 // loop_body
    %s14 = ssub.s32 %s9, 1
    %s15 = ssub.s32 %s9, 2
    %s22 = sadd.s32 1, %s17
    %p23 = scmp.ge.s32.totalorder %s22, 2
    %s24 = scalar_select %p23, 0, %s22
    %s25 = sadd.s32 1, %s16
    %s26 = scalar_select %p23, %s25, %s16
    %p27 = scmp.ge.s32.totalorder %s26, 2
    %s28 = scalar_select %p27, 0, %s26
    %p29 = scmp.lt.s32.totalorder %s17, 0
    %s30 = scalar_select %p29, %s17, 0
    %p31 = scmp.lt.s32.totalorder %s24, 0
    %s32 = scalar_select %p31, %s24, 0
    %s33 = ssub.s32 %s16, %s28
    %s34 = ssub.s32 %s30, %s32
    %s35 = sor.u32 %s33, %s34
    %p36 = scmp.eq.s32.totalorder %s35, 0
    %s38 = sadd.s32 %s37, 1
    %s39 = scalar_select %p36, %s37, %s38
    %p42 = pneg %p36
    %p43 = scmp.eq.s32.totalorder %s9, 3
    %p44 = por %p42, %p43
    %p45 = scmp.ne.s32.totalorder %s37, %s40
    %p46 = scmp.eq.s32.totalorder %s9, 0
    %p47 = por %p45, %p46
    %p48 = scmp.ne.s32.totalorder %s37, %s40
    %p49 = scmp.eq.s32.totalorder %s14, 3
    %p50 = por %p48, %p49
    %p51 = scmp.ne.s32.totalorder %s40, %s41
    %p52 = scmp.eq.s32.totalorder %s14, 0
    %p53 = por %p51, %p52
    %p54 = scmp.ne.s32.totalorder %s40, %s41
    %p55 = scmp.eq.s32.totalorder %s15, 3
    %p56 = por %p54, %p55
    %p58 = scmp.ne.s32.totalorder %s41, %s57
    %p59 = scmp.eq.s32.totalorder %s15, 0
    %p60 = por %p58, %p59
    %p61 = scmp.lt.s32.totalorder %s17, 0
    %s62 = scalar_select %p61, %s17, 0
    %p63 = scmp.lt.s32.totalorder %s24, 0
    %s64 = scalar_select %p63, %s24, 0
    %s65 = ssub.s32 %s16, %s28
    %s66 = ssub.s32 %s62, %s64
    %s67 = sor.u32 %s65, %s66
    %p68 = scmp.eq.s32.totalorder %s67, 0
    %s70 = sadd.s32 %s69, 1
    %s71 = scalar_select %p68, %s69, %s70
    %p74 = pneg %p68
    %p75 = scmp.eq.s32.totalorder %s9, 3
    %p76 = por %p74, %p75
    %p77 = scmp.ne.s32.totalorder %s69, %s72
    %p78 = scmp.eq.s32.totalorder %s9, 0
    %p79 = por %p77, %p78
    %p80 = scmp.ne.s32.totalorder %s69, %s72
    %p81 = scmp.eq.s32.totalorder %s14, 3
    %p82 = por %p80, %p81
    %p83 = scmp.ne.s32.totalorder %s72, %s73
    %p84 = scmp.eq.s32.totalorder %s14, 0
    %p85 = por %p83, %p84
    %p86 = scmp.ne.s32.totalorder %s72, %s73
    %p87 = scmp.eq.s32.totalorder %s15, 3
    %p88 = por %p86, %p87
    %p90 = scmp.ne.s32.totalorder %s73, %s89
    %p91 = scmp.eq.s32.totalorder %s15, 0
    %p92 = por %p90, %p91
    %s93 = ssub.s32 %s17, 1
    %p94 = scmp.gt.s32.totalorder %s93, 0
    %s95 = scalar_select %p94, %s93, 0
    %s96 = ssub.s32 %s24, 1
    %p97 = scmp.gt.s32.totalorder %s96, 0
    %s98 = scalar_select %p97, %s96, 0
    %s99 = ssub.s32 %s16, %s28
    %s100 = ssub.s32 %s95, %s98
    %s101 = sor.u32 %s99, %s100
    %p102 = scmp.eq.s32.totalorder %s101, 0
    %s104 = sadd.s32 %s103, 1
    %s105 = scalar_select %p102, %s103, %s104
    %p108 = pneg %p102
    %p109 = scmp.eq.s32.totalorder %s9, 3
    %p110 = por %p108, %p109
    %p111 = scmp.ne.s32.totalorder %s103, %s106
    %p112 = scmp.eq.s32.totalorder %s9, 0
    %p113 = por %p111, %p112
    %p114 = scmp.ne.s32.totalorder %s103, %s106
    %p115 = scmp.eq.s32.totalorder %s14, 3
    %p116 = por %p114, %p115
    %p117 = scmp.ne.s32.totalorder %s106, %s107
    %p118 = scmp.eq.s32.totalorder %s14, 0
    %p119 = por %p117, %p118
    %p120 = scmp.ne.s32.totalorder %s106, %s107
    %p121 = scmp.eq.s32.totalorder %s15, 3
    %p122 = por %p120, %p121
    %p124 = scmp.ne.s32.totalorder %s107, %s123
    %p125 = scmp.eq.s32.totalorder %s15, 0
    %p126 = por %p124, %p125
    %s127 = ssub.s32 %s17, 1
    %p128 = scmp.gt.s32.totalorder %s127, 0
    %s129 = scalar_select %p128, %s127, 0
    %s130 = ssub.s32 %s24, 1
    %p131 = scmp.gt.s32.totalorder %s130, 0
    %s132 = scalar_select %p131, %s130, 0
    %s133 = ssub.s32 %s16, %s28
    %s134 = ssub.s32 %s129, %s132
    %s135 = sor.u32 %s133, %s134
    %p136 = scmp.eq.s32.totalorder %s135, 0
    %s138 = sadd.s32 %s137, 1
    %s139 = scalar_select %p136, %s137, %s138
    %p142 = pneg %p136
    %p143 = scmp.eq.s32.totalorder %s9, 3
    %p144 = por %p142, %p143
    %p145 = scmp.ne.s32.totalorder %s137, %s140
    %p146 = scmp.eq.s32.totalorder %s9, 0
    %p147 = por %p145, %p146
    %p148 = scmp.ne.s32.totalorder %s137, %s140
    %p149 = scmp.eq.s32.totalorder %s14, 3
    %p150 = por %p148, %p149
    %p151 = scmp.ne.s32.totalorder %s140, %s141
    %p152 = scmp.eq.s32.totalorder %s14, 0
    %p153 = por %p151, %p152
    %p154 = scmp.ne.s32.totalorder %s140, %s141
    %p155 = scmp.eq.s32.totalorder %s15, 3
    %p156 = por %p154, %p155
    %p158 = scmp.ne.s32.totalorder %s141, %s157
    %p159 = scmp.eq.s32.totalorder %s15, 0
    %p160 = por %p158, %p159
    %p161 = scmp.le.s32.totalorder 1, %s9
    %p162 = scmp.lt.s32.totalorder %s9, 5
    %p163 = pnand %p161, %p162
    %p164 = pneg %p163
    // Predicated region
    $region9: #{sa_coronal_block.1} parent=5 // pred_check
      _
    $region10: #{sa_coronal_block.1} parent=5 // pred_check_branch
      %166 = sbr.rel (%p163) target = $region12
    $region11: #{sa_coronal_block.1} parent=5 // pred_region
      %s167 = ssub.s32 %s9, 1
    $region12: #{sa_coronal_block.1} parent=5 // pred_fallthru
      _
    %p168 = scmp.lt.s32.totalorder %s9, 4
    // Predicated region
    $region13: #{sa_coronal_block.1} parent=5 // pred_check
      %p169 = pneg %p168
    $region14: #{sa_coronal_block.1} parent=5 // pred_check_branch
      %171 = sbr.rel (%p169) target = $region16
    $region15: #{sa_coronal_block.1} parent=5 // pred_region
      // Predicated region
      $region17: #{sa_coronal_block.1} parent=15 // pred_check
        %p172 = pneg %p47
      $region18: #{sa_coronal_block.1} parent=15 // pred_check_branch
        %174 = sbr.rel (%p172) target = $region20
      $region19: #{sa_coronal_block.1} parent=15 // pred_region
        %p175 = scmp.lt.s32.totalorder %s17, 0
        %s176 = scalar_select %p175, %s17, 0
        %s177 = smul.u32 2, %s176
        %p178 = scmp.lt.s32.totalorder %s16, 1
        %s179 = scalar_select %p178, %s16, 1
        %p180 = scmp.lt.s32.totalorder %s177, 1
        %s181 = scalar_select %p180, %s177, 1
        %s182 = smul.addr %s179, 4
        %s183 = sadd.s32 %s181, %s182
        %s184 = smul.addr %s183, 8
        %s185 = scalar_lea.vmem %s0, %s184
        %p186 = scmp.lt.s32.totalorder %s17, 0
        %s187 = scalar_select %p186, %s17, 0
        %s188 = smul.u32 2, %s187
      $region20: #{sa_coronal_block.1} parent=15 // pred_fallthru
        _
      // Predicated region
      $region21: #{sa_coronal_block.1} parent=15 // pred_check
        %p189 = pneg %p79
      $region22: #{sa_coronal_block.1} parent=15 // pred_check_branch
        %191 = sbr.rel (%p189) target = $region24
      $region23: #{sa_coronal_block.1} parent=15 // pred_region
        %p192 = scmp.lt.s32.totalorder %s17, 0
        %s193 = scalar_select %p192, %s17, 0
        %s194 = smul.u32 2, %s193
        %p195 = scmp.lt.s32.totalorder %s16, 1
        %s196 = scalar_select %p195, %s16, 1
        %p197 = scmp.lt.s32.totalorder %s194, 1
        %s198 = scalar_select %p197, %s194, 1
        %s199 = smul.addr %s196, 4
        %s200 = sadd.s32 %s198, %s199
        %s201 = smul.addr %s200, 8
        %s202 = scalar_lea.vmem %s1, %s201
        %p203 = scmp.lt.s32.totalorder %s17, 0
        %s204 = scalar_select %p203, %s17, 0
        %s205 = smul.u32 2, %s204
      $region24: #{sa_coronal_block.1} parent=15 // pred_fallthru
        _
      // Predicated region
      $region25: #{sa_coronal_block.1} parent=15 // pred_check
        %p206 = pneg %p113
      $region26: #{sa_coronal_block.1} parent=15 // pred_check_branch
        %208 = sbr.rel (%p206) target = $region28
      $region27: #{sa_coronal_block.1} parent=15 // pred_region
        %s209 = ssub.s32 %s17, 1
        %p210 = scmp.gt.s32.totalorder %s209, 0
        %s211 = scalar_select %p210, %s209, 0
        %s212 = smul.u32 2, %s211
        %p213 = scmp.lt.s32.totalorder %s16, 1
        %s214 = scalar_select %p213, %s16, 1
        %p215 = scmp.lt.s32.totalorder %s212, 1
        %s216 = scalar_select %p215, %s212, 1
        %s217 = smul.addr %s214, 4
        %s218 = sadd.s32 %s216, %s217
        %s219 = smul.addr %s218, 8
        %s220 = scalar_lea.vmem %s2, %s219
        %s221 = ssub.s32 %s17, 1
        %p222 = scmp.gt.s32.totalorder %s221, 0
        %s223 = scalar_select %p222, %s221, 0
        %s224 = smul.u32 2, %s223
      $region28: #{sa_coronal_block.1} parent=15 // pred_fallthru
        _
    $region16: #{sa_coronal_block.1} parent=5 // pred_fallthru
      _
    %p225 = scmp.le.s32.totalorder 1, %s9
    %p226 = scmp.lt.s32.totalorder %s9, 5
    %p227 = pnand %p225, %p226
    %p228 = pneg %p227
    // Predicated region
    $region29: #{sa_coronal_block.1} parent=5 // pred_check
      _
    $region30: #{sa_coronal_block.1} parent=5 // pred_check_branch
      %230 = sbr.rel (%p227) target = $region32
    $region31: #{sa_coronal_block.1} parent=5 // pred_region
      %s231 = ssub.s32 %s9, 1
      %p232 = scmp.lt.s32.totalorder %s19, 0
      %s233 = scalar_select %p232, %s19, 0
      %s234 = smul.u32 2, %s233
      %p235 = scmp.lt.s32.totalorder %s18, 1
      %s236 = scalar_select %p235, %s18, 1
      %p237 = scmp.lt.s32.totalorder %s234, 1
      %s238 = scalar_select %p237, %s234, 1
      %s239 = smul.addr %s236, 4
      %s240 = sadd.s32 %s238, %s239
      %s241 = smul.addr %s240, 8
      %s242 = scalar_lea.vmem %s0, %s241
      %p243 = pneg %p53
      %p244 = pneg %p50
      %p245 = scmp.lt.s32.totalorder %s19, 0
      %s246 = scalar_select %p245, %s19, 0
      %s247 = smul.u32 2, %s246
      %p248 = scmp.lt.s32.totalorder %s18, 1
      %s249 = scalar_select %p248, %s18, 1
      %p250 = scmp.lt.s32.totalorder %s247, 1
      %s251 = scalar_select %p250, %s247, 1
      %s252 = smul.addr %s249, 4
      %s253 = sadd.s32 %s251, %s252
      %s254 = smul.addr %s253, 8
      %s255 = scalar_lea.vmem %s1, %s254
      %p256 = pneg %p85
      %p257 = pneg %p82
      %s258 = ssub.s32 %s19, 1
      %p259 = scmp.gt.s32.totalorder %s258, 0
      %s260 = scalar_select %p259, %s258, 0
      %s261 = smul.u32 2, %s260
      %p262 = scmp.lt.s32.totalorder %s18, 1
      %s263 = scalar_select %p262, %s18, 1
      %p264 = scmp.lt.s32.totalorder %s261, 1
      %s265 = scalar_select %p264, %s261, 1
      %s266 = smul.addr %s263, 4
      %s267 = sadd.s32 %s265, %s266
      %s268 = smul.addr %s267, 8
      %s269 = scalar_lea.vmem %s2, %s268
      %p270 = pneg %p119
      %p271 = pneg %p116
      %p272 = pneg %p153
      %p273 = pneg %p150
      %s274 = ssub.s32 %s19, 1
      %p275 = scmp.gt.s32.totalorder %s274, 0
      %s276 = scalar_select %p275, %s274, 0
      %s277 = smul.u32 2, %s276
      %p278 = scmp.lt.s32.totalorder %s18, 1
      %s279 = scalar_select %p278, %s18, 1
      %p280 = scmp.lt.s32.totalorder %s277, 1
      %s281 = scalar_select %p280, %s277, 1
      %s282 = smul.addr %s279, 4
      %s283 = sadd.s32 %s281, %s282
      %s284 = smul.addr %s283, 8
      %s285 = scalar_lea.vmem %s3, %s284
      %p286 = scmp.lt.s32.totalorder %s19, 0
      %s287 = scalar_select %p286, %s19, 0
      %s288 = smul.u32 2, %s287
      %p289 = scmp.lt.s32.totalorder %s18, 1
      %s290 = scalar_select %p289, %s18, 1
      %p291 = scmp.lt.s32.totalorder %s288, 1
      %s292 = scalar_select %p291, %s288, 1
      %s293 = smul.addr %s290, 4
      %s294 = sadd.s32 %s292, %s293
      %s295 = smul.addr %s294, 8
      %s296 = scalar_lea.vmem %s0, %s295
      %p297 = scmp.lt.s32.totalorder %s19, 0
      %s298 = scalar_select %p297, %s19, 0
      %s299 = smul.u32 2, %s298
      %p300 = scmp.lt.s32.totalorder %s19, 0
      %s301 = scalar_select %p300, %s19, 0
      %s302 = smul.u32 2, %s301
      %p303 = scmp.lt.s32.totalorder %s18, 1
      %s304 = scalar_select %p303, %s18, 1
      %p305 = scmp.lt.s32.totalorder %s302, 1
      %s306 = scalar_select %p305, %s302, 1
      %s307 = smul.addr %s304, 4
      %s308 = sadd.s32 %s306, %s307
      %s309 = smul.addr %s308, 8
      %s310 = scalar_lea.vmem %s1, %s309
      %p311 = scmp.lt.s32.totalorder %s19, 0
      %s312 = scalar_select %p311, %s19, 0
      %s313 = smul.u32 2, %s312
      %s314 = ssub.s32 %s19, 1
      %p315 = scmp.gt.s32.totalorder %s314, 0
      %s316 = scalar_select %p315, %s314, 0
      %s317 = smul.u32 2, %s316
      %p318 = scmp.lt.s32.totalorder %s18, 1
      %s319 = scalar_select %p318, %s18, 1
      %p320 = scmp.lt.s32.totalorder %s317, 1
      %s321 = scalar_select %p320, %s317, 1
      %s322 = smul.addr %s319, 4
      %s323 = sadd.s32 %s321, %s322
      %s324 = smul.addr %s323, 8
      %s325 = scalar_lea.vmem %s2, %s324
      %s326 = ssub.s32 %s19, 1
      %p327 = scmp.gt.s32.totalorder %s326, 0
      %s328 = scalar_select %p327, %s326, 0
      %s329 = smul.u32 2, %s328
      %s330 = ssub.s32 %s19, 1
      %p331 = scmp.gt.s32.totalorder %s330, 0
      %s332 = scalar_select %p331, %s330, 0
      %s333 = smul.u32 2, %s332
      %p334 = scmp.lt.s32.totalorder %s18, 1
      %s335 = scalar_select %p334, %s18, 1
      %p336 = scmp.lt.s32.totalorder %s333, 1
      %s337 = scalar_select %p336, %s333, 1
      %s338 = smul.addr %s335, 4
      %s339 = sadd.s32 %s337, %s338
      %s340 = smul.addr %s339, 8
      %s341 = scalar_lea.vmem %s3, %s340
      %s342 = ssub.s32 %s19, 1
      %p343 = scmp.gt.s32.totalorder %s342, 0
      %s344 = scalar_select %p343, %s342, 0
      %s345 = smul.u32 2, %s344
      %p346 = scmp.eq.s32.totalorder %s19, 0
      // Predicated region
      $region33: #{sa_coronal_block.1} parent=31 // pred_check
        %p347 = pneg %p346
      $region34: #{sa_coronal_block.1} parent=31 // pred_check_branch
        %349 = sbr.rel (%p347) target = $region36
      $region35: #{sa_coronal_block.1} parent=31 // pred_region
        %vm350 = vcmask 130048
        %351 = vst.msk [vmem:[#allocation2] sm:$0xff] %vm350, 0.0
        %352 = vst.msk [vmem:[#allocation2 + $0x8] sm:$0xff] %vm350, 0.0
      $region36: #{sa_coronal_block.1} parent=31 // pred_fallthru
        _
      %p353 = scmp.lt.s32.totalorder %s19, 1
      // Predicated region
      $region37: #{sa_coronal_block.1} parent=31 // pred_check
        %p354 = pneg %p353
      $region38: #{sa_coronal_block.1} parent=31 // pred_check_branch
        %356 = sbr.rel (%p354) target = $region40
      $region39: #{sa_coronal_block.1} parent=31 // pred_region
        %v357 = vld [vmem:[%s296] sm:$0xff]
        %v358 = vld [vmem:[%s296 + $0x8] sm:$0xff]
        %v359 = vld [vmem:[%s296 + $0x10] sm:$0xff]
        %v360 = vld [vmem:[%s296 + $0x18] sm:$0xff]
        %v361 = vld [vmem:[%s310] sm:$0xff]
        %v362 = vld [vmem:[%s310 + $0x8] sm:$0xff]
        %v363 = vld [vmem:[%s310 + $0x10] sm:$0xff]
        %v364 = vld [vmem:[%s310 + $0x18] sm:$0xff]
        %v365 = vld [vmem:[#allocation2] sm:$0xff]
        %v366 = vld [vmem:[#allocation2 + $0x8] sm:$0xff]
        %367 = vmatpush.xpose.msra.mxu0 0.0
        %368 = vmatpush.xpose.msra.mxu0 0.0
        %369 = vmatpush.xpose.msra.mxu0 0.0
        %370 = vmatpush.xpose.msra.mxu0 0.0
        %371 = vmatpush.xpose.msra.mxu0 0.0
        %372 = vmatpush.xpose.msra.mxu0 0.0
        %373 = vmatpush.xpose.msra.mxu0 0.0
        %374 = vmatpush.xpose.msra.mxu0 0.0
        %375 = vmatpush.xpose.msra.mxu0 0.0
        %376 = vmatpush.xpose.msra.mxu0 0.0
        %377 = vmatpush.xpose.msra.mxu0 0.0
        %378 = vmatpush.xpose.msra.mxu0 0.0
        %379 = vmatpush.xpose.msra.mxu0 0.0
        %380 = vmatpush.xpose.msra.mxu0 0.0
        %381 = vmatpush.xpose.msra.mxu0 %v363
        %382 = vmatpush.xpose.msra.mxu0 %v361
        %383 = vmatmul.f32.gmra.mxu0 %v357
        %v384 = vpop.f32.mrf.mxu0
        %v385 = vadd.f32 0.0, %v384
        %386 = vmatmul.f32.gmra.mxu0 %v359
        %v387 = vpop.f32.mrf.mxu0
        %v388 = vadd.f32 0.0, %v387
        %389 = vdwg.mxu0
        %390 = vmatpush.xpose.msra.mxu0 0.0
        %391 = vmatpush.xpose.msra.mxu0 0.0
        %392 = vmatpush.xpose.msra.mxu0 0.0
        %393 = vmatpush.xpose.msra.mxu0 0.0
        %394 = vmatpush.xpose.msra.mxu0 0.0
        %395 = vmatpush.xpose.msra.mxu0 0.0
        %396 = vmatpush.xpose.msra.mxu0 0.0
        %397 = vmatpush.xpose.msra.mxu0 0.0
        %398 = vmatpush.xpose.msra.mxu0 0.0
        %399 = vmatpush.xpose.msra.mxu0 0.0
        %400 = vmatpush.xpose.msra.mxu0 0.0
        %401 = vmatpush.xpose.msra.mxu0 0.0
        %402 = vmatpush.xpose.msra.mxu0 0.0
        %403 = vmatpush.xpose.msra.mxu0 0.0
        %404 = vmatpush.xpose.msra.mxu0 %v364
        %405 = vmatpush.xpose.msra.mxu0 %v362
        %406 = vmatmul.f32.gmra.mxu0 %v358
        %v407 = vpop.f32.mrf.mxu0
        %v408 = vadd.f32 %v385, %v407
        %409 = vmatmul.f32.gmra.mxu0 %v360
        %v410 = vpop.f32.mrf.mxu0
        %v411 = vadd.f32 %v388, %v410
        %412 = vdwg.mxu0
        %v413 = vadd.f32 %v365, %v408
        %v414 = vadd.f32 %v366, %v411
        %vm415 = vcmask 130048
        %416 = vst.msk [vmem:[#allocation2] sm:$0xff] %vm415, %v413
        %417 = vst.msk [vmem:[#allocation2 + $0x8] sm:$0xff] %vm415, %v414
      $region40: #{sa_coronal_block.1} parent=31 // pred_fallthru
        _
      // Predicated region
      $region41: #{sa_coronal_block.1} parent=31 // pred_check
        %p418 = pneg %p346
      $region42: #{sa_coronal_block.1} parent=31 // pred_check_branch
        %420 = sbr.rel (%p418) target = $region44
      $region43: #{sa_coronal_block.1} parent=31 // pred_region
        %v421 = vld [vmem:[#allocation2] sm:$0xff]
        %v422 = vld [vmem:[#allocation2 + $0x8] sm:$0xff]
        %vm423 = vcmask 130048
        %v424 = vsel %vm423, %v421, -inf
        %425 = vmax.xlane.f32.xlu0 %v424
        %v426 = vpop.xlane.xlu0 %425
        %v427 = vsel %vm423, %v422, -inf
        %428 = vmax.xlane.f32.xlu0 %v427
        %v429 = vpop.xlane.xlu0 %428
        %v430 = vsub.f32 %v421, %v426
        %v431 = vsub.f32 %v422, %v429
        %v432 = vmul.f32 %v430, 1.442695
        %v433 = vpow.pop %v432
        %v434 = vmul.f32 %v431, 1.442695
        %v435 = vpow.pop %v434
        %v436 = vsel %vm423, %v433, 0.0
        %437 = vadd.xlane.f32.xlu0 %v436
        %v438 = vpop.xlane.xlu0 %437
        %v439 = vsel %vm423, %v435, 0.0
        %440 = vadd.xlane.f32.xlu0 %v439
        %v441 = vpop.xlane.xlu0 %440
        %v442 = vrcp.pop %v438
        %v443 = vrcp.pop %v441
        %v444 = vmul.f32 %v438, %v442
        %v445 = vmul.f32 %v441, %v443
        %v446 = vsub.f32 2.0, %v444
        %v447 = vsub.f32 2.0, %v445
        %v448 = vmul.f32 %v442, %v446
        %v449 = vmul.f32 %v443, %v447
        %v450 = vmul.f32 %v433, %v448
        %v451 = vmul.f32 %v435, %v449
        %452 = vst.msk [vmem:[#allocation2] sm:$0xff] %vm423, %v450
        %453 = vst.msk [vmem:[#allocation2 + $0x8] sm:$0xff] %vm423, %v451
      $region44: #{sa_coronal_block.1} parent=31 // pred_fallthru
        _
      %p454 = scmp.ge.s32.totalorder %s19, 1
      // Predicated region
      $region45: #{sa_coronal_block.1} parent=31 // pred_check
        %p455 = pneg %p454
      $region46: #{sa_coronal_block.1} parent=31 // pred_check_branch
        %457 = sbr.rel (%p455) target = $region48
      $region47: #{sa_coronal_block.1} parent=31 // pred_region
        %v458 = vld [vmem:[%s325] sm:$0xff]
        %v459 = vld [vmem:[%s325 + $0x8] sm:$0xff]
        %v460 = vld [vmem:[%s325 + $0x10] sm:$0xff]
        %v461 = vld [vmem:[%s325 + $0x18] sm:$0xff]
        %v462 = vld [vmem:[#allocation2] sm:$0xff]
        %v463 = vld [vmem:[#allocation2 + $0x8] sm:$0xff]
        %vm464 = vcmask 130048
        %v466 = vsel %vm464, %v462, 0
        %v469 = vsel %vm464, %v463, 0
        %471 = vmatpush.msra.mxu0 0.0
        %472 = vmatpush.msra.mxu0 0.0
        %473 = vmatpush.msra.mxu0 0.0
        %474 = vmatpush.msra.mxu0 0.0
        %475 = vmatpush.msra.mxu0 0.0
        %476 = vmatpush.msra.mxu0 0.0
        %477 = vmatpush.msra.mxu0 0.0
        %478 = vmatpush.msra.mxu0 0.0
        %479 = vmatpush.msra.mxu0 0.0
        %480 = vmatpush.msra.mxu0 0.0
        %481 = vmatpush.msra.mxu0 0.0
        %482 = vmatpush.msra.mxu0 0.0
        %483 = vmatpush.msra.mxu0 0.0
        %484 = vmatpush.msra.mxu0 0.0
        %485 = vmatpush.msra.mxu0 %v460
        %486 = vmatpush.msra.mxu0 %v458
        %487 = vmatmul.f32.gmra.mxu0 %v466
        %v488 = vpop.f32.mrf.mxu0
        %v489 = vadd.f32 0.0, %v488
        %490 = vmatmul.f32.gmra.mxu0 %v469
        %v491 = vpop.f32.mrf.mxu0
        %v492 = vadd.f32 0.0, %v491
        %493 = vdwg.mxu0
        %494 = vmatpush.msra.mxu0 0.0
        %495 = vmatpush.msra.mxu0 0.0
        %496 = vmatpush.msra.mxu0 0.0
        %497 = vmatpush.msra.mxu0 0.0
        %498 = vmatpush.msra.mxu0 0.0
        %499 = vmatpush.msra.mxu0 0.0
        %500 = vmatpush.msra.mxu0 0.0
        %501 = vmatpush.msra.mxu0 0.0
        %502 = vmatpush.msra.mxu0 0.0
        %503 = vmatpush.msra.mxu0 0.0
        %504 = vmatpush.msra.mxu0 0.0
        %505 = vmatpush.msra.mxu0 0.0
        %506 = vmatpush.msra.mxu0 0.0
        %507 = vmatpush.msra.mxu0 0.0
        %508 = vmatpush.msra.mxu0 %v461
        %509 = vmatpush.msra.mxu0 %v459
        %510 = vmatmul.f32.gmra.mxu0 %v466
        %v511 = vpop.f32.mrf.mxu0
        %v512 = vadd.f32 0.0, %v511
        %513 = vmatmul.f32.gmra.mxu0 %v469
        %v514 = vpop.f32.mrf.mxu0
        %v515 = vadd.f32 0.0, %v514
        %516 = vdwg.mxu0
        %517 = vst [vmem:[%s341] sm:$0xff] %v489
        %518 = vst [vmem:[%s341 + $0x8] sm:$0xff] %v512
        %519 = vst [vmem:[%s341 + $0x10] sm:$0xff] %v492
        %520 = vst [vmem:[%s341 + $0x18] sm:$0xff] %v515
      $region48: #{sa_coronal_block.1} parent=31 // pred_fallthru
        _
      %s521 = ssub.s32 %s19, 1
      %p522 = scmp.gt.s32.totalorder %s521, 0
      %s523 = scalar_select %p522, %s521, 0
      %s524 = smul.u32 2, %s523
      %p525 = scmp.lt.s32.totalorder %s18, 1
      %s526 = scalar_select %p525, %s18, 1
      %p527 = scmp.lt.s32.totalorder %s524, 1
      %s528 = scalar_select %p527, %s524, 1
      %s529 = smul.addr %s526, 4
      %s530 = sadd.s32 %s528, %s529
      %s531 = smul.addr %s530, 8
      %s532 = scalar_lea.vmem %s3, %s531
      // Predicated region
      $region49: #{sa_coronal_block.1} parent=31 // pred_check
        %p533 = pneg %p150
      $region50: #{sa_coronal_block.1} parent=31 // pred_check_branch
        %535 = sbr.rel (%p533) target = $region52
      $region51: #{sa_coronal_block.1} parent=31 // pred_region
        %s536 = ssub.s32 %s19, 1
        %p537 = scmp.gt.s32.totalorder %s536, 0
        %s538 = scalar_select %p537, %s536, 0
        %s539 = smul.u32 2, %s538
      $region52: #{sa_coronal_block.1} parent=31 // pred_fallthru
        _
    $region32: #{sa_coronal_block.1} parent=5 // pred_fallthru
      _
    %p540 = scmp.le.s32.totalorder 2, %s9
    // Predicated region
    $region53: #{sa_coronal_block.1} parent=5 // pred_check
      %p541 = pneg %p540
    $region54: #{sa_coronal_block.1} parent=5 // pred_check_branch
      %543 = sbr.rel (%p541) target = $region56
    $region55: #{sa_coronal_block.1} parent=5 // pred_region
      %s544 = ssub.s32 %s9, 2
      // Predicated region
      $region57: #{sa_coronal_block.1} parent=55 // pred_check
        %p545 = pneg %p156
      $region58: #{sa_coronal_block.1} parent=55 // pred_check_branch
        %547 = sbr.rel (%p545) target = $region60
      $region59: #{sa_coronal_block.1} parent=55 // pred_region
        %s548 = ssub.s32 %s21, 1
        %p549 = scmp.gt.s32.totalorder %s548, 0
        %s550 = scalar_select %p549, %s548, 0
        %s551 = smul.u32 2, %s550
        %p552 = scmp.lt.s32.totalorder %s20, 1
        %s553 = scalar_select %p552, %s20, 1
        %p554 = scmp.lt.s32.totalorder %s551, 1
        %s555 = scalar_select %p554, %s551, 1
        %s556 = smul.addr %s553, 4
        %s557 = sadd.s32 %s555, %s556
        %s558 = smul.addr %s557, 8
        %s559 = scalar_lea.vmem %s3, %s558
      $region60: #{sa_coronal_block.1} parent=55 // pred_fallthru
        _
    $region56: #{sa_coronal_block.1} parent=5 // pred_fallthru
      _
  $region6: #{sa_coronal_block.1} parent=0 // loop_footer
    %s13 = sadd.s32 1, %s9
  $region7: #{sa_coronal_block.1} parent=0 // loop_footer_branch
    %8 = sbr.rel target = $region3
  $region8: #{sa_coronal_block.1} parent=0 // loop_exit
    _

</llo_original>
